<compile_context>
chip_gen: v7x
topology: tpu7x:2x2x1
jax: 0.10.0
libtpu: 0.0.40
codegen_flags: <defaults>
</compile_context>

<pallas_src>
import jax
import jax.numpy as jnp
from jax import lax
from jax.experimental import pallas as pl
from jax.experimental.pallas import tpu as pltpu


def lv_kernel(x_ref, w_ref, g_ref, o_ref):
    x = x_ref[...]                                   # (TB, N) f32
    # inter[b, i] = sum_j x[b, j] * interaction[i, j]  == x @ interaction.T.
    # Contract dim 1 of both operands on the MXU against the VMEM-resident weight
    # tile (no wrapper-side transpose, no extra HBM traffic).
    inter = lax.dot_general(
        x, w_ref[...],
        dimension_numbers=(((1,), (1,)), ((), ())),
        preferred_element_type=jnp.float32)
    # Fused: x*inter + x*(g+1) == x * (inter + (g + 1)); (1, N) g row broadcasts.
    o_ref[...] = (x * (inter + (g_ref[...] + 1.0))).astype(o_ref.dtype)


def _choose_tb(B, N):
    """Largest MXU/lane-aligned batch tile that fits the smallest VMEM (v7x, 64 MiB)."""
    budget = int(0.55 * (64 << 20))              # stay well under v7x physical VMEM
    resident = N * N * 4 + max(N, 128) * 4       # single-buffered weight + g row
    tb = 1024
    while tb > 128 and resident + 2 * 2 * tb * N * 4 > budget:
        tb //= 2
    if B <= tb:
        return B                                  # whole batch in one block
    # Prefer >= 4 grid steps (pipeline depth + both v7x TensorCores busy) as long as
    # tiles stay >= 128 rows (HBM-roofline efficiency drops for smaller tiles).
    while tb > 128 and pl.cdiv(B, tb) < 4:
        tb //= 2
    return tb


def abs_lv_forward(x, interaction, g, *, tb=None, force_pallas=False):
    """x: (B, N) f32, interaction: (N, N) f32, g: (N,) f32 -> (B, N) f32."""
    B, N = x.shape
    assert interaction.shape == (N, N) and g.shape == (N,)

    # Tiny problems: a single-step pallas_call is pure launch overhead; use XLA.
    if not force_pallas and B * N * x.dtype.itemsize < (128 << 10):
        inter = jnp.einsum("ij,bj->bi", interaction, x)
        return x * (inter + (g + 1.0))

    if tb is None:
        tb = _choose_tb(B, N)
    tb = min(tb, B)
    grid_b = pl.cdiv(B, tb)                      # ragged last block is masked on store

    g2d = g.reshape(1, N)

    # VMEM: single-buffered resident weight + g, double-buffered x/out tiles, plus
    # headroom for compiler internals. Always pass a limit (v5e default is ~16 MiB)
    # and clamp to 60 MiB (v7x physical VMEM is 64 MiB).
    resident_bytes = N * N * 4 + max(N, 128) * 4
    tile_bytes = 2 * 2 * tb * N * 4
    need_bytes = resident_bytes + tile_bytes + (2 << 20)
    vmem_limit = int(min(max(need_bytes, 32 << 20), 60 << 20))

    return pl.pallas_call(
        lv_kernel,
        out_shape=jax.ShapeDtypeStruct((B, N), x.dtype),
        grid_spec=pltpu.PrefetchScalarGridSpec(
            num_scalar_prefetch=0,
            grid=(grid_b,),
            in_specs=[
                pl.BlockSpec((tb, N), lambda i: (i, 0)),           # x: batch-tiled
                pl.BlockSpec((N, N), lambda i: (0, 0),
                             pipeline_mode=pl.Buffered(1)),        # weight: resident
                pl.BlockSpec((1, N), lambda i: (0, 0),
                             pipeline_mode=pl.Buffered(1)),        # g: resident
            ],
            out_specs=pl.BlockSpec((tb, N), lambda i: (i, 0)),
        ),
        compiler_params=pltpu.CompilerParams(
            dimension_semantics=("parallel",),   # shard batch across TCs (v7x megacore)
            vmem_limit_bytes=vmem_limit,
        ),
        cost_estimate=pl.CostEstimate(
            flops=2 * B * N * N,
            bytes_accessed=4 * (2 * B * N + N * N + N),
            transcendentals=0,
        ),
    )(x, interaction, g2d)


def abs_lv_reference(x, interaction, g):
    inter = jnp.einsum("ij,bj->bi", interaction, x)
    return x * inter + x * (g + 1.0)


if __name__ == "__main__":
    key = jax.random.PRNGKey(0)
    k_x, k_g, k_w, k_x2 = jax.random.split(key, 4)

    n_vertices = 128
    # Deterministic "torch.rand"-style init: uniform [0, 1)
    g = jax.random.uniform(k_g, (n_vertices,), dtype=jnp.float32)
    interaction = jax.random.uniform(k_w, (n_vertices, n_vertices), dtype=jnp.float32)

    # Small case (B=8): default dispatch uses the XLA fallback; also force the
    # single-block Pallas path to exercise the kernel at small shapes.
    x_small = jax.random.uniform(k_x, (8, n_vertices), dtype=jnp.float32)
    ref_small = abs_lv_reference(x_small, interaction, g)
    out_fallback = jax.block_until_ready(abs_lv_forward(x_small, interaction, g))
    out_small = jax.block_until_ready(
        abs_lv_forward(x_small, interaction, g, force_pallas=True))
    assert out_small.shape == (8, n_vertices)
    assert jnp.allclose(out_fallback, ref_small, rtol=1e-5, atol=1e-4), "fallback mismatch"
    assert jnp.allclose(out_small, ref_small, rtol=1e-5, atol=1e-4), "pallas (small) mismatch"

    # Ragged multi-tile case (B=500, tb=128): 4 grid steps, masked partial last block.
    x_big = jax.random.uniform(k_x2, (500, n_vertices), dtype=jnp.float32)
    out_big = jax.block_until_ready(abs_lv_forward(x_big, interaction, g, tb=128))
    ref_big = abs_lv_reference(x_big, interaction, g)
    assert out_big.shape == (500, n_vertices)
    assert jnp.allclose(out_big, ref_big, rtol=1e-5, atol=1e-4), "pallas (ragged) mismatch"

    print("KERNEL_OK")
</pallas_src>

<mosaic_0001>
module attributes {stable_mosaic.version = 11 : i64} {
  func.func @lv_kernel(%arg0: i32, %arg1: memref<8x128xf32, #tpu.memory_space<vmem>>, %arg2: memref<128x128xf32, #tpu.memory_space<vmem>>, %arg3: memref<1x128xf32, #tpu.memory_space<vmem>>, %arg4: memref<8x128xf32, #tpu.memory_space<vmem>>) attributes {dimension_semantics = [#tpu.dimension_semantics<parallel>], iteration_bounds = array<i64: 1>, scalar_prefetch = 0 : i64, scratch_operands = 0 : i64, tpu.core_type = #tpu.core_type<tc>, window_params = [{transform_indices = @transform_0, window_bounds = array<i64: 8, 128>}, {pipeline_mode = #tpu.pipeline_mode<synchronous>, transform_indices = @transform_1, window_bounds = array<i64: 128, 128>}, {pipeline_mode = #tpu.pipeline_mode<synchronous>, transform_indices = @transform_2, window_bounds = array<i64: 1, 128>}, {transform_indices = @transform_3, window_bounds = array<i64: 8, 128>}]} {
    %c0 = arith.constant 0 : index
    %c0_0 = arith.constant 0 : index
    %0 = vector.load %arg1[%c0, %c0_0] : memref<8x128xf32, #tpu.memory_space<vmem>>, vector<8x128xf32>
    %c0_1 = arith.constant 0 : index
    %c0_2 = arith.constant 0 : index
    %1 = vector.load %arg2[%c0_1, %c0_2] : memref<128x128xf32, #tpu.memory_space<vmem>>, vector<128x128xf32>
    %cst = arith.constant dense<0.000000e+00> : vector<8x128xf32>
    %2 = tpu.matmul %0, %1, %cst {dimension_numbers = #tpu.dot_dimension_numbers<[1], [1], [0], [0], [0, 0, 1, 0], [], []>} : vector<8x128xf32>, vector<128x128xf32>, vector<8x128xf32> -> vector<8x128xf32>
    %c0_3 = arith.constant 0 : index
    %c0_4 = arith.constant 0 : index
    %3 = vector.load %arg3[%c0_3, %c0_4] : memref<1x128xf32, #tpu.memory_space<vmem>>, vector<1x128xf32>
    %cst_5 = arith.constant 1.000000e+00 : f32
    %4 = vector.broadcast %cst_5 : f32 to vector<1x128xf32>
    %5 = arith.addf %3, %4 : vector<1x128xf32>
    %6 = vector.broadcast %5 : vector<1x128xf32> to vector<8x128xf32>
    %7 = arith.addf %2, %6 : vector<8x128xf32>
    %8 = arith.mulf %0, %7 : vector<8x128xf32>
    %c0_6 = arith.constant 0 : index
    %c0_7 = arith.constant 0 : index
    %9 = vector.load %arg4[%c0_6, %c0_7] : memref<8x128xf32, #tpu.memory_space<vmem>>, vector<8x128xf32>
    tpu.vector_store %arg4[%c0_6, %c0_7], %8 {strides = array<i32>} : memref<8x128xf32, #tpu.memory_space<vmem>>, vector<8x128xf32>,
    return
  }
  func.func @transform_0(%arg0: i32) -> (i32, i32) {
    %c0_i32 = arith.constant 0 : i32
    %c0_i32_0 = arith.constant 0 : i32
    return %arg0, %c0_i32 : i32, i32
  }
  func.func @transform_1(%arg0: i32) -> (i32, i32) {
    %c0_i32 = arith.constant 0 : i32
    %c0_i32_0 = arith.constant 0 : i32
    %c0_i32_1 = arith.constant 0 : i32
    return %c0_i32, %c0_i32_0 : i32, i32
  }
  func.func @transform_2(%arg0: i32) -> (i32, i32) {
    %c0_i32 = arith.constant 0 : i32
    %c0_i32_0 = arith.constant 0 : i32
    %c0_i32_1 = arith.constant 0 : i32
    return %c0_i32, %c0_i32_0 : i32, i32
  }
  func.func @transform_3(%arg0: i32) -> (i32, i32) {
    %c0_i32 = arith.constant 0 : i32
    %c0_i32_0 = arith.constant 0 : i32
    return %arg0, %c0_i32 : i32, i32
  }
}

</mosaic_0001>

<llo_original>
// kernel: tpu_custom_call.1
$region0: #{tpu_custom_call.1}
  #allocation0 [shape = 'u32[]', space=smem, size = 0x4, offset = 0x4, fixed_abs, tag = 'smem constant byte address 0x4 - core index']
  #allocation1 [shape = 'u32[144,128]{1,0:T(1,128)}', space=vmem, size = 0x12000, scoped, tag = 'internal scratch']
  %s0 = inlined_call_operand.hbm [shape: f32[8,128], index: 0, kind: input, shape index: {}]
  %s1 = inlined_call_operand.hbm [shape: f32[128,128], index: 1, kind: input, shape index: {}]
  %s2 = inlined_call_operand.vmem [shape: f32[1,128], index: 2, kind: input, shape index: {}]
  %s3 = inlined_call_operand.hbm [shape: f32[8,128], index: 3, kind: output, shape index: {}]
  %s4 = sld [smem:[#allocation0]]
  $region30: #{tpu_custom_call.1} parent=0
    _
  %s6 = ssub.s32 1, %s4
  %s7 = scalar_select 0, %s6, %s4
  $region1: #{tpu_custom_call.1} parent=0
    #allocation2 [shape = 'u8[4096]{0}', space=vmem, size = 0x1000, scoped, tag = 'input window, operand 0, single buffered']
    #allocation3 [shape = 's32[1]{0}', space=sflag, size = 0x4, scoped, tag = 'scoped memory for tpu_custom_call.1']
    #allocation4 [shape = 's32[1]{0}', space=sflag, size = 0x4, scoped, tag = 'scoped memory for tpu_custom_call.1']
    #allocation5 [shape = 'u8[65536]{0}', space=vmem, size = 0x10000, scoped, tag = 'input window, operand 1, single buffered']
    #allocation6 [shape = 's32[1]{0}', space=sflag, size = 0x4, scoped, tag = 'scoped memory for tpu_custom_call.1']
    #allocation7 [shape = 'u8[4096]{0}', space=vmem, size = 0x1000, scoped, tag = 'output window, operand 0, single buffered']
    %8 = vsyncpa [#allocation3], 0
    %9 = vsyncpa [#allocation6], 0
    %10 = vsyncpa [#allocation4], 0
    // Predicated region
    $region2: #{tpu_custom_call.1} parent=1 // pred_check
      _
    $region3: #{tpu_custom_call.1} parent=1 // pred_check_branch
      %12 = sbr.rel (0) target = $region5
    $region4: #{tpu_custom_call.1} parent=1 // pred_region
      %s14 = ssub.s32 128, 128
      %15 = vsyncadd [#allocation3], %s14
      %s17 = sshll.u32 [#allocation2], 4
      %s18 = int_to_ptr.vmem [resolvable:$true] %s17
      %20 = dma.hbm_to_vmem [thread:$0]  %s0, 128, %s18, [#allocation3]
    $region5: #{tpu_custom_call.1} parent=1 // pred_fallthru
      _
    // Predicated region
    $region6: #{tpu_custom_call.1} parent=1 // pred_check
      _
    $region7: #{tpu_custom_call.1} parent=1 // pred_check_branch
      %22 = sbr.rel (0) target = $region9
    $region8: #{tpu_custom_call.1} parent=1 // pred_region
      %s24 = ssub.s32 2048, 2048
      %25 = vsyncadd [#allocation6], %s24
      %s26 = sshll.u32 [#allocation5], 4
      %s27 = int_to_ptr.vmem [resolvable:$true] %s26
      %32 = dma.hbm_to_vmem [thread:$0]  %s1, 2048, %s27, [#allocation6], 128, 128, 8
    $region9: #{tpu_custom_call.1} parent=1 // pred_fallthru
      _
    // Predicated region
    $region10: #{tpu_custom_call.1} parent=1 // pred_check
      _
    $region11: #{tpu_custom_call.1} parent=1 // pred_check_branch
      %34 = sbr.rel (0) target = $region13
    $region12: #{tpu_custom_call.1} parent=1 // pred_region
      _
    $region13: #{tpu_custom_call.1} parent=1 // pred_fallthru
      _
    // Predicated region
    $region14: #{tpu_custom_call.1} parent=1 // pred_check
      _
    $region15: #{tpu_custom_call.1} parent=1 // pred_check_branch
      %36 = sbr.rel (0) target = $region17
    $region16: #{tpu_custom_call.1} parent=1 // pred_region
      %37 = dma.done [#allocation3], 128
    $region17: #{tpu_custom_call.1} parent=1 // pred_fallthru
      _
    // Predicated region
    $region18: #{tpu_custom_call.1} parent=1 // pred_check
      _
    $region19: #{tpu_custom_call.1} parent=1 // pred_check_branch
      %39 = sbr.rel (0) target = $region21
    $region20: #{tpu_custom_call.1} parent=1 // pred_region
      %40 = dma.done [#allocation6], 2048
    $region21: #{tpu_custom_call.1} parent=1 // pred_fallthru
      _
    %v41 = vld [vmem:[#allocation2] sm:$0xff]
    %v42 = vld [vmem:[#allocation5] sm:$0xff]
    %v43 = vld [vmem:[#allocation5 + $0x8] sm:$0xff]
    %v44 = vld [vmem:[#allocation5 + $0x10] sm:$0xff]
    %v45 = vld [vmem:[#allocation5 + $0x18] sm:$0xff]
    %v46 = vld [vmem:[#allocation5 + $0x20] sm:$0xff]
    %v47 = vld [vmem:[#allocation5 + $0x28] sm:$0xff]
    %v48 = vld [vmem:[#allocation5 + $0x30] sm:$0xff]
    %v49 = vld [vmem:[#allocation5 + $0x38] sm:$0xff]
    %v50 = vld [vmem:[#allocation5 + $0x40] sm:$0xff]
    %v51 = vld [vmem:[#allocation5 + $0x48] sm:$0xff]
    %v52 = vld [vmem:[#allocation5 + $0x50] sm:$0xff]
    %v53 = vld [vmem:[#allocation5 + $0x58] sm:$0xff]
    %v54 = vld [vmem:[#allocation5 + $0x60] sm:$0xff]
    %v55 = vld [vmem:[#allocation5 + $0x68] sm:$0xff]
    %v56 = vld [vmem:[#allocation5 + $0x70] sm:$0xff]
    %v57 = vld [vmem:[#allocation5 + $0x78] sm:$0xff]
    %v58 = vld [vmem:[%s2] sm:$0x1]
    %v59 = vadd.f32 %v58, 1.0
    %v61 = vlaneseq
    %v62 = vshrl.u32 %v61, 7
    %v63 = vsub.s32 0, %v62
    %v64 = vrot.slane %v59, %v63
    %66 = vmatprep.subr.mxu0 0.0
    %67 = vmatpush1.xpose.msra.mxu0 %v42
    %68 = vmatprep.subr.mxu0 0.0
    %69 = vmatpush1.xpose.msra.mxu0 %v43
    %70 = vmatprep.subr.mxu0 0.0
    %71 = vmatpush1.xpose.msra.mxu0 %v44
    %72 = vmatprep.subr.mxu0 0.0
    %73 = vmatpush1.xpose.msra.mxu0 %v45
    %74 = vmatprep.subr.mxu0 0.0
    %75 = vmatpush1.xpose.msra.mxu0 %v46
    %76 = vmatprep.subr.mxu0 0.0
    %77 = vmatpush1.xpose.msra.mxu0 %v47
    %78 = vmatprep.subr.mxu0 0.0
    %79 = vmatpush1.xpose.msra.mxu0 %v48
    %80 = vmatprep.subr.mxu0 0.0
    %81 = vmatpush1.xpose.msra.mxu0 %v49
    %82 = vmatprep.subr.mxu0 0.0
    %83 = vmatpush1.xpose.msra.mxu0 %v50
    %84 = vmatprep.subr.mxu0 0.0
    %85 = vmatpush1.xpose.msra.mxu0 %v51
    %86 = vmatprep.subr.mxu0 0.0
    %87 = vmatpush1.xpose.msra.mxu0 %v52
    %88 = vmatprep.subr.mxu0 0.0
    %89 = vmatpush1.xpose.msra.mxu0 %v53
    %90 = vmatprep.subr.mxu0 0.0
    %91 = vmatpush1.xpose.msra.mxu0 %v54
    %92 = vmatprep.subr.mxu0 0.0
    %93 = vmatpush1.xpose.msra.mxu0 %v55
    %94 = vmatprep.subr.mxu0 0.0
    %95 = vmatpush1.xpose.msra.mxu0 %v56
    %96 = vmatprep.subr.mxu0 0.0
    %97 = vmatpush1.xpose.msra.mxu0 %v57
    %98 = vmatprep.subr.mxu0 0.0
    %99 = vmatpush1.xpose.msra.mxu0 0.0
    %100 = vmatprep.subr.mxu0 0.0
    %101 = vmatpush1.xpose.msra.mxu0 0.0
    %102 = vmatprep.subr.mxu0 0.0
    %103 = vmatpush1.xpose.msra.mxu0 0.0
    %104 = vmatprep.subr.mxu0 0.0
    %105 = vmatpush1.xpose.msra.mxu0 0.0
    %106 = vmatprep.subr.mxu0 0.0
    %107 = vmatpush1.xpose.msra.mxu0 0.0
    %108 = vmatprep.subr.mxu0 0.0
    %109 = vmatpush1.xpose.msra.mxu0 0.0
    %110 = vmatprep.subr.mxu0 0.0
    %111 = vmatpush1.xpose.msra.mxu0 0.0
    %112 = vmatprep.subr.mxu0 0.0
    %113 = vmatpush1.xpose.msra.mxu0 0.0
    %114 = vmatprep.subr.mxu0 0.0
    %115 = vmatpush1.xpose.msra.mxu0 0.0
    %116 = vmatprep.subr.mxu0 0.0
    %117 = vmatpush1.xpose.msra.mxu0 0.0
    %118 = vmatprep.subr.mxu0 0.0
    %119 = vmatpush1.xpose.msra.mxu0 0.0
    %120 = vmatprep.subr.mxu0 0.0
    %121 = vmatpush1.xpose.msra.mxu0 0.0
    %122 = vmatprep.subr.mxu0 0.0
    %123 = vmatpush1.xpose.msra.mxu0 0.0
    %124 = vmatprep.subr.mxu0 0.0
    %125 = vmatpush1.xpose.msra.mxu0 0.0
    %126 = vmatprep.subr.mxu0 0.0
    %127 = vmatpush1.xpose.msra.mxu0 0.0
    %128 = vmatprep.subr.mxu0 0.0
    %129 = vmatpush1.xpose.msra.mxu0 0.0
    %130 = vmatprep.mubr.f32.mxu0 0.0
    %131 = vmatmul.mubr.f32.gmra.mrb[0].mxu0 %v41
    %v132 = vpop.f32.mrb[0].mxu0
    %v133 = vadd.f32 %v64, %v132
    %v134 = vpop.f32.mrb[0].mxu0
    %135 = vdwg.mxu0
    %v136 = vmul.f32 %v41, %v133
    %137 = vst [vmem:[#allocation7] sm:$0xff] %v136
    // Predicated region
    $region22: #{tpu_custom_call.1} parent=1 // pred_check
      _
    $region23: #{tpu_custom_call.1} parent=1 // pred_check_branch
      %139 = sbr.rel (0) target = $region25
    $region24: #{tpu_custom_call.1} parent=1 // pred_region
      %s141 = ssub.s32 128, 128
      %142 = vsyncadd [#allocation4], %s141
      %s144 = sshll.u32 [#allocation7], 4
      %s145 = int_to_ptr.vmem [resolvable:$true] %s144
      %147 = dma.vmem_to_hbm [thread:$0]  %s145, 128, %s3, [#allocation4]
    $region25: #{tpu_custom_call.1} parent=1 // pred_fallthru
      _
    // Predicated region
    $region26: #{tpu_custom_call.1} parent=1 // pred_check
      _
    $region27: #{tpu_custom_call.1} parent=1 // pred_check_branch
      %149 = sbr.rel (0) target = $region29
    $region28: #{tpu_custom_call.1} parent=1 // pred_region
      %150 = dma.done [#allocation4], 128
    $region29: #{tpu_custom_call.1} parent=1 // pred_fallthru
      _
    %151 = vsyncpa [#allocation3], 1
    %152 = vsyncpa [#allocation6], 1
    %153 = vsyncpa [#allocation4], 1

</llo_original>
